<compile_context>
chip_gen: v5e
topology: v5e:2x2
jax: 0.10.0
libtpu: 0.0.40
codegen_flags: <defaults>
</compile_context>

<pallas_src>
import jax
import jax.numpy as jnp
from jax import lax
from jax.experimental import pallas as pl
from jax.experimental.pallas import tpu as pltpu


def _round_up(x, m):
    return (x + m - 1) // m * m


def _convt_matmul_kernel(w_ref, p_ref, b_ref, o_ref):
    # w_ref: (C_out, Kc_pad)    flattened + transposed (flipped) kernel taps
    # p_ref: (Kc_pad, m_block)  im2col patches, transposed (lane axis = M)
    # b_ref: (C_out, 1)
    # o_ref: (C_out, m_block)   lane-dense output slab
    acc = jnp.dot(w_ref[...], p_ref[...], preferred_element_type=jnp.float32)
    o_ref[...] = (acc + b_ref[...]).astype(o_ref.dtype)


def conv_transpose2d_pallas(x_nchw, weight, bias, stride, padding):
    """ConvTranspose2d (PyTorch semantics, output_padding=0, groups=1) via Pallas.

    x_nchw:  (N, C_in, H, W)
    weight:  (C_in, C_out, K, K)    -- PyTorch ConvTranspose2d weight layout
    bias:    (C_out,)
    returns: (N, C_out, H_out, W_out)
    """
    N, C_in, H, W = x_nchw.shape
    _, C_out, K, _ = weight.shape

    H_out = (H - 1) * stride - 2 * padding + K
    W_out = (W - 1) * stride - 2 * padding + K

    # --- wrapper glue: express conv-transpose as a regular conv on a dilated input ---
    x_nhwc = jnp.transpose(x_nchw, (0, 2, 3, 1))                    # (N, H, W, C_in)
    H_dil = (H - 1) * stride + 1
    W_dil = (W - 1) * stride + 1
    x_dil = jnp.zeros((N, H_dil, W_dil, C_in), x_nhwc.dtype)
    x_dil = x_dil.at[:, ::stride, ::stride, :].set(x_nhwc)
    pad_eff = K - 1 - padding
    if pad_eff >= 0:
        x_pad = jnp.pad(x_dil, ((0, 0), (pad_eff, pad_eff), (pad_eff, pad_eff), (0, 0)))
    else:  # PyTorch allows padding > K-1, which becomes a crop of the dilated input
        c = -pad_eff
        x_pad = x_dil[:, c:H_dil - c, c:W_dil - c, :]

    # --- im2col (transposed): (K*K*C_in, N*H_out*W_out) ---
    taps = []
    for kh in range(K):
        for kw in range(K):
            taps.append(x_pad[:, kh:kh + H_out, kw:kw + W_out, :])  # (N, H_out, W_out, C_in)
    patches = jnp.stack(taps, axis=0)                               # (K*K, N, H_out, W_out, C_in)
    patches = jnp.transpose(patches, (0, 4, 1, 2, 3))               # (K*K, C_in, N, H_out, W_out)

    M = N * H_out * W_out
    Kc = K * K * C_in
    patches = patches.reshape(Kc, M)

    # --- flipped weight, flattened to (C_out, K*K*C_in) ---
    w_flip = jnp.transpose(weight[:, :, ::-1, ::-1], (2, 3, 0, 1))  # (K, K, C_in, C_out) HWIO
    w_t = jnp.transpose(w_flip.reshape(Kc, C_out), (1, 0))          # (C_out, Kc)
    b2d = bias.astype(jnp.float32).reshape(C_out, 1)

    # --- pad to (8,128)-friendly shapes ---
    Kc_pad = _round_up(Kc, 8)
    m_block = min(_round_up(M, 256) // 2, 8192)                     # multiple of 128
    M_pad = _round_up(M, m_block)
    n_blocks = M_pad // m_block                                     # >= 2 when M permits (v7x TCs)

    patches_t = jnp.pad(patches, ((0, Kc_pad - Kc), (0, M_pad - M)))
    w_t = jnp.pad(w_t, ((0, 0), (0, Kc_pad - Kc)))

    out_t = pl.pallas_call(
        _convt_matmul_kernel,
        out_shape=jax.ShapeDtypeStruct((C_out, M_pad), x_nchw.dtype),
        grid_spec=pltpu.PrefetchScalarGridSpec(
            num_scalar_prefetch=0,
            grid=(n_blocks,),
            in_specs=[
                pl.BlockSpec((C_out, Kc_pad), lambda i: (0, 0)),
                pl.BlockSpec((Kc_pad, m_block), lambda i: (0, i)),
                pl.BlockSpec((C_out, 1), lambda i: (0, 0)),
            ],
            out_specs=pl.BlockSpec((C_out, m_block), lambda i: (0, i)),
        ),
        compiler_params=pltpu.CompilerParams(
            dimension_semantics=("parallel",),
        ),
    )(w_t, patches_t, b2d)                                          # (C_out, M_pad)

    out_t = out_t[:, :M].reshape(C_out, N, H_out, W_out)
    return jnp.transpose(out_t, (1, 0, 2, 3))                       # (N, C_out, H_out, W_out)


def conv_trans_in_lstm_forward(inputs, weight, bias, stride, padding):
    """Equivalent of ConvTransinLSTM.forward.

    inputs: (seq, batch, C_in, H, W)  -> (seq, batch, C_out, H_out, W_out)
    """
    seq, batch, C_in, H, W = inputs.shape
    x = inputs.reshape(seq * batch, C_in, H, W)
    out = conv_transpose2d_pallas(x, weight, bias, stride, padding)
    _, C_out, H_out, W_out = out.shape
    return out.reshape(seq, batch, C_out, H_out, W_out)


if __name__ == "__main__":
    # module config (small, deterministic)
    in_channels, out_channels = 4, 8
    kernel_size, stride, padding = 3, 2, 1
    seq, batch, H, W = 4, 2, 8, 8

    key = jax.random.PRNGKey(0)
    k_x, k_w, k_b = jax.random.split(key, 3)

    inputs = jax.random.normal(k_x, (seq, batch, in_channels, H, W), jnp.float32)
    # PyTorch ConvTranspose2d weight shape: (in_channels, out_channels, kH, kW)
    weight = jax.random.normal(k_w, (in_channels, out_channels, kernel_size, kernel_size),
                               jnp.float32) * 0.1
    bias = jax.random.normal(k_b, (out_channels,), jnp.float32) * 0.1

    out = jax.jit(
        lambda x, w, b: conv_trans_in_lstm_forward(x, w, b, stride, padding)
    )(inputs, weight, bias)
    out = jax.block_until_ready(out)

    # independent reference via XLA's dilated conv (same conv-transpose semantics)
    x_flat = inputs.reshape(seq * batch, in_channels, H, W)
    x_nhwc = jnp.transpose(x_flat, (0, 2, 3, 1))
    w_flip = jnp.transpose(weight[:, :, ::-1, ::-1], (2, 3, 0, 1))   # HWIO
    ref = lax.conv_general_dilated(
        x_nhwc, w_flip,
        window_strides=(1, 1),
        padding=[(kernel_size - 1 - padding,) * 2] * 2,
        lhs_dilation=(stride, stride),
        dimension_numbers=("NHWC", "HWIO", "NHWC"),
    ) + bias[None, None, None, :]
    ref = jnp.transpose(ref, (0, 3, 1, 2)).reshape(out.shape)

    H_out = (H - 1) * stride - 2 * padding + kernel_size
    assert out.shape == (seq, batch, out_channels, H_out, H_out)
    assert jnp.allclose(out, ref, atol=1e-4, rtol=1e-4), "mismatch vs XLA reference"
    print("KERNEL_OK")
</pallas_src>

<mosaic_0001>
module attributes {stable_mosaic.version = 11 : i64} {
  func.func @_convt_matmul_kernel(%arg0: i32, %arg1: memref<8x40xf32, #tpu.memory_space<vmem>>, %arg2: memref<40x1024xf32, #tpu.memory_space<vmem>>, %arg3: memref<8x1xf32, #tpu.memory_space<vmem>>, %arg4: memref<8x1024xf32, #tpu.memory_space<vmem>>) attributes {dimension_semantics = [#tpu.dimension_semantics<parallel>], iteration_bounds = array<i64: 2>, scalar_prefetch = 0 : i64, scratch_operands = 0 : i64, tpu.core_type = #tpu.core_type<tc>, window_params = [{pipeline_mode = #tpu.pipeline_mode<synchronous>, transform_indices = @transform_0, window_bounds = array<i64: 8, 40>}, {transform_indices = @transform_1, window_bounds = array<i64: 40, 1024>}, {pipeline_mode = #tpu.pipeline_mode<synchronous>, transform_indices = @transform_2, window_bounds = array<i64: 8, 1>}, {transform_indices = @transform_3, window_bounds = array<i64: 8, 1024>}]} {
    %c0 = arith.constant 0 : index
    %c0_0 = arith.constant 0 : index
    %0 = vector.load %arg1[%c0, %c0_0] : memref<8x40xf32, #tpu.memory_space<vmem>>, vector<8x40xf32>
    %c0_1 = arith.constant 0 : index
    %c0_2 = arith.constant 0 : index
    %1 = vector.load %arg2[%c0_1, %c0_2] : memref<40x1024xf32, #tpu.memory_space<vmem>>, vector<40x1024xf32>
    %cst = arith.constant dense<0.000000e+00> : vector<8x1024xf32>
    %2 = tpu.matmul %0, %1, %cst {dimension_numbers = #tpu.dot_dimension_numbers<[1], [0], [0], [1], [0, 0, 1, 1], [], []>} : vector<8x40xf32>, vector<40x1024xf32>, vector<8x1024xf32> -> vector<8x1024xf32>
    %c0_3 = arith.constant 0 : index
    %c0_4 = arith.constant 0 : index
    %3 = vector.load %arg3[%c0_3, %c0_4] : memref<8x1xf32, #tpu.memory_space<vmem>>, vector<8x1xf32>
    %4 = vector.broadcast %3 : vector<8x1xf32> to vector<8x1024xf32>
    %5 = arith.addf %2, %4 : vector<8x1024xf32>
    %c0_5 = arith.constant 0 : index
    %c0_6 = arith.constant 0 : index
    %6 = vector.load %arg4[%c0_5, %c0_6] : memref<8x1024xf32, #tpu.memory_space<vmem>>, vector<8x1024xf32>
    tpu.vector_store %arg4[%c0_5, %c0_6], %5 {strides = array<i32>} : memref<8x1024xf32, #tpu.memory_space<vmem>>, vector<8x1024xf32>,
    return
  }
  func.func @transform_0(%arg0: i32) -> (i32, i32) {
    %c0_i32 = arith.constant 0 : i32
    %c0_i32_0 = arith.constant 0 : i32
    %c0_i32_1 = arith.constant 0 : i32
    return %c0_i32, %c0_i32_0 : i32, i32
  }
  func.func @transform_1(%arg0: i32) -> (i32, i32) {
    %c0_i32 = arith.constant 0 : i32
    %c0_i32_0 = arith.constant 0 : i32
    return %c0_i32, %arg0 : i32, i32
  }
  func.func @transform_2(%arg0: i32) -> (i32, i32) {
    %c0_i32 = arith.constant 0 : i32
    %c0_i32_0 = arith.constant 0 : i32
    %c0_i32_1 = arith.constant 0 : i32
    return %c0_i32, %c0_i32_0 : i32, i32
  }
  func.func @transform_3(%arg0: i32) -> (i32, i32) {
    %c0_i32 = arith.constant 0 : i32
    %c0_i32_0 = arith.constant 0 : i32
    return %c0_i32, %arg0 : i32, i32
  }
}

</mosaic_0001>

<llo_original>
// kernel: _lambda_.1
$region0: #{_lambda_.1}
  #allocation0 [shape = 'u32[]', space=smem, size = 0x4, offset = 0x4, fixed_abs, tag = 'smem constant byte address 0x4 - core index']
  #allocation1 [shape = 'u32[72,128]{1,0:T(1,128)}', space=vmem, size = 0x9000, scoped, tag = 'internal scratch']
  %s0 = inlined_call_operand.vmem [shape: f32[8,40], index: 0, kind: input, shape index: {}]
  %s1 = inlined_call_operand.vmem [shape: f32[40,2048], index: 1, kind: input, shape index: {}]
  %s2 = inlined_call_operand.vmem [shape: f32[8,1], index: 2, kind: input, shape index: {}]
  %s3 = inlined_call_operand.vmem [shape: f32[8,2048], index: 3, kind: output, shape index: {}]
  %s4 = sld [smem:[#allocation0]]
  $region68: #{_lambda_.1} parent=0
    _
  %s6 = ssub.s32 1, %s4
  %s7 = scalar_select 0, %s6, %s4
  $region1: #{_lambda_.1} parent=0
    #allocation2 [shape = 'u8[327680]{0}', space=vmem, size = 0x50000, scoped, tag = 'input window, operand 1']
    loop: start=0, step=1, limit=4
    $region2: #{_lambda_.1} parent=1 // loop_pre_header
      _
    $region3: #{_lambda_.1} parent=1 // loop_header
      %s9 = sphi 0, %s13
      %p10 = scmp.ge.s32.totalorder %s9, 4
      %s17 = sphi 0, %s17
      %s19 = sphi 0, %s17
      %s20 = sphi 0, %s19
      %s34 = sphi 0, %s20
      %s40 = sphi 0, %s42
      %s43 = sphi 0, %s40
      %s44 = sphi 0, %s43
      %s60 = sphi 0, %s44
      %s64 = sphi 0, %s64
      %s66 = sphi 0, %s64
      %s67 = sphi 0, %s66
      %s81 = sphi 0, %s67
      %s87 = sphi 0, %s89
      %s90 = sphi 0, %s87
      %s91 = sphi 0, %s90
      %s107 = sphi 0, %s91
    $region4: #{_lambda_.1} parent=1 // loop_header_branch
      %12 = sbr.rel (%p10) target = $region8
    $region5: #{_lambda_.1} parent=1 // loop_body
      %s14 = ssub.s32 %s9, 1
      %s15 = ssub.s32 %s9, 2
      %s16 = sadd.s32 %s9, 1
      %s18 = sadd.s32 %s17, 1
      %p21 = scmp.eq.s32.totalorder %s9, 1
      %p22 = scmp.ne.s32.totalorder %s17, %s19
      %p23 = scmp.eq.s32.totalorder %s9, 0
      %p24 = por %p22, %p23
      %p25 = scmp.ne.s32.totalorder %s17, %s19
      %p26 = scmp.eq.s32.totalorder %s14, 1
      %p27 = por %p25, %p26
      %p28 = scmp.ne.s32.totalorder %s19, %s20
      %p29 = scmp.eq.s32.totalorder %s14, 0
      %p30 = por %p28, %p29
      %p31 = scmp.ne.s32.totalorder %s19, %s20
      %p32 = scmp.eq.s32.totalorder %s15, 1
      %p33 = por %p31, %p32
      %p35 = scmp.ne.s32.totalorder %s20, %s34
      %p36 = scmp.eq.s32.totalorder %s15, 0
      %p37 = por %p35, %p36
      %s38 = ssub.s32 %s9, %s16
      %p39 = scmp.eq.s32.totalorder %s38, 0
      %s41 = sadd.s32 %s40, 1
      %s42 = scalar_select %p39, %s40, %s41
      %p45 = pneg %p39
      %p46 = scmp.eq.s32.totalorder %s9, 1
      %p47 = por %p45, %p46
      %p48 = scmp.ne.s32.totalorder %s40, %s43
      %p49 = scmp.eq.s32.totalorder %s9, 0
      %p50 = por %p48, %p49
      %p51 = scmp.ne.s32.totalorder %s40, %s43
      %p52 = scmp.eq.s32.totalorder %s14, 1
      %p53 = por %p51, %p52
      %p54 = scmp.ne.s32.totalorder %s43, %s44
      %p55 = scmp.eq.s32.totalorder %s14, 0
      %p56 = por %p54, %p55
      %p57 = scmp.ne.s32.totalorder %s43, %s44
      %p58 = scmp.eq.s32.totalorder %s15, 1
      %p59 = por %p57, %p58
      %p61 = scmp.ne.s32.totalorder %s44, %s60
      %p62 = scmp.eq.s32.totalorder %s15, 0
      %p63 = por %p61, %p62
      %s65 = sadd.s32 %s64, 1
      %p68 = scmp.eq.s32.totalorder %s9, 1
      %p69 = scmp.ne.s32.totalorder %s64, %s66
      %p70 = scmp.eq.s32.totalorder %s9, 0
      %p71 = por %p69, %p70
      %p72 = scmp.ne.s32.totalorder %s64, %s66
      %p73 = scmp.eq.s32.totalorder %s14, 1
      %p74 = por %p72, %p73
      %p75 = scmp.ne.s32.totalorder %s66, %s67
      %p76 = scmp.eq.s32.totalorder %s14, 0
      %p77 = por %p75, %p76
      %p78 = scmp.ne.s32.totalorder %s66, %s67
      %p79 = scmp.eq.s32.totalorder %s15, 1
      %p80 = por %p78, %p79
      %p82 = scmp.ne.s32.totalorder %s67, %s81
      %p83 = scmp.eq.s32.totalorder %s15, 0
      %p84 = por %p82, %p83
      %s85 = ssub.s32 %s9, %s16
      %p86 = scmp.eq.s32.totalorder %s85, 0
      %s88 = sadd.s32 %s87, 1
      %s89 = scalar_select %p86, %s87, %s88
      %p92 = pneg %p86
      %p93 = scmp.eq.s32.totalorder %s9, 1
      %p94 = por %p92, %p93
      %p95 = scmp.ne.s32.totalorder %s87, %s90
      %p96 = scmp.eq.s32.totalorder %s9, 0
      %p97 = por %p95, %p96
      %p98 = scmp.ne.s32.totalorder %s87, %s90
      %p99 = scmp.eq.s32.totalorder %s14, 1
      %p100 = por %p98, %p99
      %p101 = scmp.ne.s32.totalorder %s90, %s91
      %p102 = scmp.eq.s32.totalorder %s14, 0
      %p103 = por %p101, %p102
      %p104 = scmp.ne.s32.totalorder %s90, %s91
      %p105 = scmp.eq.s32.totalorder %s15, 1
      %p106 = por %p104, %p105
      %p108 = scmp.ne.s32.totalorder %s91, %s107
      %p109 = scmp.eq.s32.totalorder %s15, 0
      %p110 = por %p108, %p109
      %p111 = scmp.le.s32.totalorder 1, %s9
      %p112 = scmp.lt.s32.totalorder %s9, 3
      %p113 = pnand %p111, %p112
      %p114 = pneg %p113
      // Predicated region
      $region9: #{_lambda_.1} parent=5 // pred_check
        _
      $region10: #{_lambda_.1} parent=5 // pred_check_branch
        %116 = sbr.rel (%p113) target = $region12
      $region11: #{_lambda_.1} parent=5 // pred_region
        %s117 = ssub.s32 %s9, 1
        // Predicated region
        $region13: #{_lambda_.1} parent=11 // pred_check
          %p118 = pneg %p30
        $region14: #{_lambda_.1} parent=11 // pred_check_branch
          %120 = sbr.rel (%p118) target = $region16
        $region15: #{_lambda_.1} parent=11 // pred_region
          _
        $region16: #{_lambda_.1} parent=11 // pred_fallthru
          _
        // Predicated region
        $region17: #{_lambda_.1} parent=11 // pred_check
          %p121 = pneg %p77
        $region18: #{_lambda_.1} parent=11 // pred_check_branch
          %123 = sbr.rel (%p121) target = $region20
        $region19: #{_lambda_.1} parent=11 // pred_region
          _
        $region20: #{_lambda_.1} parent=11 // pred_fallthru
          _
      $region12: #{_lambda_.1} parent=5 // pred_fallthru
        _
      %p124 = scmp.lt.s32.totalorder %s9, 2
      // Predicated region
      $region21: #{_lambda_.1} parent=5 // pred_check
        %p125 = pneg %p124
      $region22: #{_lambda_.1} parent=5 // pred_check_branch
        %127 = sbr.rel (%p125) target = $region24
      $region23: #{_lambda_.1} parent=5 // pred_region
        // Predicated region
        $region25: #{_lambda_.1} parent=23 // pred_check
          %p128 = pneg %p50
        $region26: #{_lambda_.1} parent=23 // pred_check_branch
          %130 = sbr.rel (%p128) target = $region28
        $region27: #{_lambda_.1} parent=23 // pred_region
          %s131 = sand.u32 %s40, 1
          %s132 = sand.u32 %s40, 1
          %s133 = smul.addr %s132, 320
          %s134 = scalar_lea.vmem [#allocation2], %s133
          %s135 = smul.u32 8, %s9
          %s136 = smul.addr %s135, 8
          %s137 = scalar_lea.vmem %s1, %s136
          // Predicated region
          $region29: #{_lambda_.1} parent=27 // pred_check
            _
          $region30: #{_lambda_.1} parent=27 // pred_check_branch
            %139 = sbr.rel (0) target = $region32
          $region31: #{_lambda_.1} parent=27 // pred_region
            // Predicated region
            $region33: #{_lambda_.1} parent=31 // pred_check
              _
            $region34: #{_lambda_.1} parent=31 // pred_check_branch
              %141 = sbr.rel (0) target = $region36
            $region35: #{_lambda_.1} parent=31 // pred_region
              loop: start=0, step=1, limit=1
              $region37: #{_lambda_.1} parent=35 // loop_pre_header
                _
              $region38: #{_lambda_.1} parent=35 // loop_header
                %s143 = sphi 0, %s147
                %p144 = scmp.ge.s32.totalorder %s143, 1
                %s148 = sphi %s137, %s137
                %s149 = sphi %s134, %s134
              $region39: #{_lambda_.1} parent=35 // loop_header_branch
                %146 = sbr.rel (%p144) target = $region43
              $region40: #{_lambda_.1} parent=35 // loop_body
                %v150 = vld [vmem:[%s148] sm:$0xff]
                %151 = vst [vmem:[%s149] sm:$0xff] %v150
                %v152 = vld [vmem:[%s148 + $0x8] sm:$0xff]
                %153 = vst [vmem:[%s149 + $0x8] sm:$0xff] %v152
                %v154 = vld [vmem:[%s148 + $0x10] sm:$0xff]
                %155 = vst [vmem:[%s149 + $0x10] sm:$0xff] %v154
                %v156 = vld [vmem:[%s148 + $0x18] sm:$0xff]
                %157 = vst [vmem:[%s149 + $0x18] sm:$0xff] %v156
                %v158 = vld [vmem:[%s148 + $0x20] sm:$0xff]
                %159 = vst [vmem:[%s149 + $0x20] sm:$0xff] %v158
                %v160 = vld [vmem:[%s148 + $0x28] sm:$0xff]
                %161 = vst [vmem:[%s149 + $0x28] sm:$0xff] %v160
                %v162 = vld [vmem:[%s148 + $0x30] sm:$0xff]
                %163 = vst [vmem:[%s149 + $0x30] sm:$0xff] %v162
                %v164 = vld [vmem:[%s148 + $0x38] sm:$0xff]
                %165 = vst [vmem:[%s149 + $0x38] sm:$0xff] %v164
                %v166 = vld [vmem:[%s148 + $0x80] sm:$0xff]
                %167 = vst [vmem:[%s149 + $0x40] sm:$0xff] %v166
                %v168 = vld [vmem:[%s148 + $0x88] sm:$0xff]
                %169 = vst [vmem:[%s149 + $0x48] sm:$0xff] %v168
                %v170 = vld [vmem:[%s148 + $0x90] sm:$0xff]
                %171 = vst [vmem:[%s149 + $0x50] sm:$0xff] %v170
                %v172 = vld [vmem:[%s148 + $0x98] sm:$0xff]
                %173 = vst [vmem:[%s149 + $0x58] sm:$0xff] %v172
                %v174 = vld [vmem:[%s148 + $0xa0] sm:$0xff]
                %175 = vst [vmem:[%s149 + $0x60] sm:$0xff] %v174
                %v176 = vld [vmem:[%s148 + $0xa8] sm:$0xff]
                %177 = vst [vmem:[%s149 + $0x68] sm:$0xff] %v176
                %v178 = vld [vmem:[%s148 + $0xb0] sm:$0xff]
                %179 = vst [vmem:[%s149 + $0x70] sm:$0xff] %v178
                %v180 = vld [vmem:[%s148 + $0xb8] sm:$0xff]
                %181 = vst [vmem:[%s149 + $0x78] sm:$0xff] %v180
                %v182 = vld [vmem:[%s148 + $0x100] sm:$0xff]
                %183 = vst [vmem:[%s149 + $0x80] sm:$0xff] %v182
                %v184 = vld [vmem:[%s148 + $0x108] sm:$0xff]
                %185 = vst [vmem:[%s149 + $0x88] sm:$0xff] %v184
                %v186 = vld [vmem:[%s148 + $0x110] sm:$0xff]
                %187 = vst [vmem:[%s149 + $0x90] sm:$0xff] %v186
                %v188 = vld [vmem:[%s148 + $0x118] sm:$0xff]
                %189 = vst [vmem:[%s149 + $0x98] sm:$0xff] %v188
                %v190 = vld [vmem:[%s148 + $0x120] sm:$0xff]
                %191 = vst [vmem:[%s149 + $0xa0] sm:$0xff] %v190
                %v192 = vld [vmem:[%s148 + $0x128] sm:$0xff]
                %193 = vst [vmem:[%s149 + $0xa8] sm:$0xff] %v192
                %v194 = vld [vmem:[%s148 + $0x130] sm:$0xff]
                %195 = vst [vmem:[%s149 + $0xb0] sm:$0xff] %v194
                %v196 = vld [vmem:[%s148 + $0x138] sm:$0xff]
                %197 = vst [vmem:[%s149 + $0xb8] sm:$0xff] %v196
                %v198 = vld [vmem:[%s148 + $0x180] sm:$0xff]
                %199 = vst [vmem:[%s149 + $0xc0] sm:$0xff] %v198
                %v200 = vld [vmem:[%s148 + $0x188] sm:$0xff]
                %201 = vst [vmem:[%s149 + $0xc8] sm:$0xff] %v200
                %v202 = vld [vmem:[%s148 + $0x190] sm:$0xff]
                %203 = vst [vmem:[%s149 + $0xd0] sm:$0xff] %v202
                %v204 = vld [vmem:[%s148 + $0x198] sm:$0xff]
                %205 = vst [vmem:[%s149 + $0xd8] sm:$0xff] %v204
                %v206 = vld [vmem:[%s148 + $0x1a0] sm:$0xff]
                %207 = vst [vmem:[%s149 + $0xe0] sm:$0xff] %v206
                %v208 = vld [vmem:[%s148 + $0x1a8] sm:$0xff]
                %209 = vst [vmem:[%s149 + $0xe8] sm:$0xff] %v208
                %v210 = vld [vmem:[%s148 + $0x1b0] sm:$0xff]
                %211 = vst [vmem:[%s149 + $0xf0] sm:$0xff] %v210
                %v212 = vld [vmem:[%s148 + $0x1b8] sm:$0xff]
                %213 = vst [vmem:[%s149 + $0xf8] sm:$0xff] %v212
                %v214 = vld [vmem:[%s148 + $0x200] sm:$0xff]
                %215 = vst [vmem:[%s149 + $0x100] sm:$0xff] %v214
                %v216 = vld [vmem:[%s148 + $0x208] sm:$0xff]
                %217 = vst [vmem:[%s149 + $0x108] sm:$0xff] %v216
                %v218 = vld [vmem:[%s148 + $0x210] sm:$0xff]
                %219 = vst [vmem:[%s149 + $0x110] sm:$0xff] %v218
                %v220 = vld [vmem:[%s148 + $0x218] sm:$0xff]
                %221 = vst [vmem:[%s149 + $0x118] sm:$0xff] %v220
                %v222 = vld [vmem:[%s148 + $0x220] sm:$0xff]
                %223 = vst [vmem:[%s149 + $0x120] sm:$0xff] %v222
                %v224 = vld [vmem:[%s148 + $0x228] sm:$0xff]
                %225 = vst [vmem:[%s149 + $0x128] sm:$0xff] %v224
                %v226 = vld [vmem:[%s148 + $0x230] sm:$0xff]
                %227 = vst [vmem:[%s149 + $0x130] sm:$0xff] %v226
                %v228 = vld [vmem:[%s148 + $0x238] sm:$0xff]
                %229 = vst [vmem:[%s149 + $0x138] sm:$0xff] %v228
              $region41: #{_lambda_.1} parent=35 // loop_footer
                %s147 = sadd.s32 1, %s143
              $region42: #{_lambda_.1} parent=35 // loop_footer_branch
                %142 = sbr.rel target = $region38
              $region43: #{_lambda_.1} parent=35 // loop_exit
                _
            $region36: #{_lambda_.1} parent=31 // pred_fallthru
              _
            // Predicated region
            $region44: #{_lambda_.1} parent=31 // pred_check
              _
            $region45: #{_lambda_.1} parent=31 // pred_check_branch
              %231 = sbr.rel target = $region47
            $region46: #{_lambda_.1} parent=31 // pred_region
              _
            $region47: #{_lambda_.1} parent=31 // pred_fallthru
              _
          $region32: #{_lambda_.1} parent=27 // pred_fallthru
            _
          %232 = vnop
        $region28: #{_lambda_.1} parent=23 // pred_fallthru
          _
      $region24: #{_lambda_.1} parent=5 // pred_fallthru
        _
      %p233 = scmp.le.s32.totalorder 1, %s9
      %p234 = scmp.lt.s32.totalorder %s9, 3
      %p235 = pnand %p233, %p234
      %p236 = pneg %p235
      // Predicated region
      $region48: #{_lambda_.1} parent=5 // pred_check
        _
      $region49: #{_lambda_.1} parent=5 // pred_check_branch
        %238 = sbr.rel (%p235) target = $region51
      $region50: #{_lambda_.1} parent=5 // pred_region
        %s239 = ssub.s32 %s9, 1
        %s240 = sand.u32 %s43, 1
        %s241 = sand.u32 %s43, 1
        %s242 = smul.addr %s241, 320
        %s243 = scalar_lea.vmem [#allocation2], %s242
        // Predicated region
        $region52: #{_lambda_.1} parent=50 // pred_check
          %p244 = pneg %p56
        $region53: #{_lambda_.1} parent=50 // pred_check_branch
          %246 = sbr.rel (%p244) target = $region55
        $region54: #{_lambda_.1} parent=50 // pred_region
          _
        $region55: #{_lambda_.1} parent=50 // pred_fallthru
          _
        %p247 = pneg %p30
        %p248 = pneg %p27
        %s249 = sand.u32 %s43, 1
        %s250 = sand.u32 %s43, 1
        %s251 = smul.addr %s250, 320
        %s252 = scalar_lea.vmem [#allocation2], %s251
        %p253 = pneg %p56
        %p254 = pneg %p53
        %p255 = pneg %p77
        %p256 = pneg %p74
        %p257 = pneg %p103
        %p258 = pneg %p100
        %s259 = smul.u32 8, %s14
        %p260 = scmp.lt.s32.totalorder %s259, 15
        %s261 = scalar_select %p260, %s259, 15
        %s262 = smul.addr %s261, 8
        %s263 = scalar_lea.vmem %s3, %s262
        %s264 = smul.u32 8, %s14
        %s265 = smul.u32 8, %s14
        %p266 = scmp.lt.s32.totalorder %s265, 15
        %s267 = scalar_select %p266, %s265, 15
        %s268 = smul.addr %s267, 8
        %s269 = scalar_lea.vmem %s3, %s268
        %s270 = smul.u32 8, %s14
        %v271 = vld [vmem:[%s0] sm:$0xff]
        %v272 = vld [vmem:[%s243] sm:$0xff]
        %v273 = vld [vmem:[%s243 + $0x8] sm:$0xff]
        %v274 = vld [vmem:[%s243 + $0x10] sm:$0xff]
        %v275 = vld [vmem:[%s243 + $0x18] sm:$0xff]
        %v276 = vld [vmem:[%s243 + $0x20] sm:$0xff]
        %v277 = vld [vmem:[%s243 + $0x28] sm:$0xff]
        %v278 = vld [vmem:[%s243 + $0x30] sm:$0xff]
        %v279 = vld [vmem:[%s243 + $0x38] sm:$0xff]
        %v280 = vld [vmem:[%s243 + $0x40] sm:$0xff]
        %v281 = vld [vmem:[%s243 + $0x48] sm:$0xff]
        %v282 = vld [vmem:[%s243 + $0x50] sm:$0xff]
        %v283 = vld [vmem:[%s243 + $0x58] sm:$0xff]
        %v284 = vld [vmem:[%s243 + $0x60] sm:$0xff]
        %v285 = vld [vmem:[%s243 + $0x68] sm:$0xff]
        %v286 = vld [vmem:[%s243 + $0x70] sm:$0xff]
        %v287 = vld [vmem:[%s243 + $0x78] sm:$0xff]
        %v288 = vld [vmem:[%s243 + $0x80] sm:$0xff]
        %v289 = vld [vmem:[%s243 + $0x88] sm:$0xff]
        %v290 = vld [vmem:[%s243 + $0x90] sm:$0xff]
        %v291 = vld [vmem:[%s243 + $0x98] sm:$0xff]
        %v292 = vld [vmem:[%s243 + $0xa0] sm:$0xff]
        %v293 = vld [vmem:[%s243 + $0xa8] sm:$0xff]
        %v294 = vld [vmem:[%s243 + $0xb0] sm:$0xff]
        %v295 = vld [vmem:[%s243 + $0xb8] sm:$0xff]
        %v296 = vld [vmem:[%s243 + $0xc0] sm:$0xff]
        %v297 = vld [vmem:[%s243 + $0xc8] sm:$0xff]
        %v298 = vld [vmem:[%s243 + $0xd0] sm:$0xff]
        %v299 = vld [vmem:[%s243 + $0xd8] sm:$0xff]
        %v300 = vld [vmem:[%s243 + $0xe0] sm:$0xff]
        %v301 = vld [vmem:[%s243 + $0xe8] sm:$0xff]
        %v302 = vld [vmem:[%s243 + $0xf0] sm:$0xff]
        %v303 = vld [vmem:[%s243 + $0xf8] sm:$0xff]
        %v304 = vld [vmem:[%s243 + $0x100] sm:$0xff]
        %v305 = vld [vmem:[%s243 + $0x108] sm:$0xff]
        %v306 = vld [vmem:[%s243 + $0x110] sm:$0xff]
        %v307 = vld [vmem:[%s243 + $0x118] sm:$0xff]
        %v308 = vld [vmem:[%s243 + $0x120] sm:$0xff]
        %v309 = vld [vmem:[%s243 + $0x128] sm:$0xff]
        %v310 = vld [vmem:[%s243 + $0x130] sm:$0xff]
        %v311 = vld [vmem:[%s243 + $0x138] sm:$0xff]
        %v312 = vld [vmem:[%s2] sm:$0xff]
        %314 = vset.pattern.permute.xlu0 0
        %315 = vperm.xlu0 %314, %v312
        %v316 = vpop.permute.xlu0 %315
        %vm318 = vcmask 326656
        %v320 = vsel %vm318, %v271, 0
        %322 = vmatpush.msra.mxu0 0.0
        %323 = vmatpush.msra.mxu0 0.0
        %324 = vmatpush.msra.mxu0 0.0
        %325 = vmatpush.msra.mxu0 0.0
        %326 = vmatpush.msra.mxu0 0.0
        %327 = vmatpush.msra.mxu0 0.0
        %328 = vmatpush.msra.mxu0 0.0
        %329 = vmatpush.msra.mxu0 0.0
        %330 = vmatpush.msra.mxu0 0.0
        %331 = vmatpush.msra.mxu0 0.0
        %332 = vmatpush.msra.mxu0 0.0
        %333 = vmatpush.msra.mxu0 %v304
        %334 = vmatpush.msra.mxu0 %v296
        %335 = vmatpush.msra.mxu0 %v288
        %336 = vmatpush.msra.mxu0 %v280
        %337 = vmatpush.msra.mxu0 %v272
        %338 = vmatmul.f32.gmra.mxu0 %v320
        %v339 = vpop.f32.mrf.mxu0
        %v340 = vadd.f32 %v316, %v339
        %341 = vdwg.mxu0
        %342 = vmatpush.msra.mxu0 0.0
        %343 = vmatpush.msra.mxu0 0.0
        %344 = vmatpush.msra.mxu0 0.0
        %345 = vmatpush.msra.mxu0 0.0
        %346 = vmatpush.msra.mxu0 0.0
        %347 = vmatpush.msra.mxu0 0.0
        %348 = vmatpush.msra.mxu0 0.0
        %349 = vmatpush.msra.mxu0 0.0
        %350 = vmatpush.msra.mxu0 0.0
        %351 = vmatpush.msra.mxu0 0.0
        %352 = vmatpush.msra.mxu0 0.0
        %353 = vmatpush.msra.mxu0 %v305
        %354 = vmatpush.msra.mxu0 %v297
        %355 = vmatpush.msra.mxu0 %v289
        %356 = vmatpush.msra.mxu0 %v281
        %357 = vmatpush.msra.mxu0 %v273
        %358 = vmatmul.f32.gmra.mxu0 %v320
        %v359 = vpop.f32.mrf.mxu0
        %v360 = vadd.f32 %v316, %v359
        %361 = vdwg.mxu0
        %362 = vmatpush.msra.mxu0 0.0
        %363 = vmatpush.msra.mxu0 0.0
        %364 = vmatpush.msra.mxu0 0.0
        %365 = vmatpush.msra.mxu0 0.0
        %366 = vmatpush.msra.mxu0 0.0
        %367 = vmatpush.msra.mxu0 0.0
        %368 = vmatpush.msra.mxu0 0.0
        %369 = vmatpush.msra.mxu0 0.0
        %370 = vmatpush.msra.mxu0 0.0
        %371 = vmatpush.msra.mxu0 0.0
        %372 = vmatpush.msra.mxu0 0.0
        %373 = vmatpush.msra.mxu0 %v306
        %374 = vmatpush.msra.mxu0 %v298
        %375 = vmatpush.msra.mxu0 %v290
        %376 = vmatpush.msra.mxu0 %v282
        %377 = vmatpush.msra.mxu0 %v274
        %378 = vmatmul.f32.gmra.mxu0 %v320
        %v379 = vpop.f32.mrf.mxu0
        %v380 = vadd.f32 %v316, %v379
        %381 = vdwg.mxu0
        %382 = vmatpush.msra.mxu0 0.0
        %383 = vmatpush.msra.mxu0 0.0
        %384 = vmatpush.msra.mxu0 0.0
        %385 = vmatpush.msra.mxu0 0.0
        %386 = vmatpush.msra.mxu0 0.0
        %387 = vmatpush.msra.mxu0 0.0
        %388 = vmatpush.msra.mxu0 0.0
        %389 = vmatpush.msra.mxu0 0.0
        %390 = vmatpush.msra.mxu0 0.0
        %391 = vmatpush.msra.mxu0 0.0
        %392 = vmatpush.msra.mxu0 0.0
        %393 = vmatpush.msra.mxu0 %v307
        %394 = vmatpush.msra.mxu0 %v299
        %395 = vmatpush.msra.mxu0 %v291
        %396 = vmatpush.msra.mxu0 %v283
        %397 = vmatpush.msra.mxu0 %v275
        %398 = vmatmul.f32.gmra.mxu0 %v320
        %v399 = vpop.f32.mrf.mxu0
        %v400 = vadd.f32 %v316, %v399
        %401 = vdwg.mxu0
        %402 = vmatpush.msra.mxu0 0.0
        %403 = vmatpush.msra.mxu0 0.0
        %404 = vmatpush.msra.mxu0 0.0
        %405 = vmatpush.msra.mxu0 0.0
        %406 = vmatpush.msra.mxu0 0.0
        %407 = vmatpush.msra.mxu0 0.0
        %408 = vmatpush.msra.mxu0 0.0
        %409 = vmatpush.msra.mxu0 0.0
        %410 = vmatpush.msra.mxu0 0.0
        %411 = vmatpush.msra.mxu0 0.0
        %412 = vmatpush.msra.mxu0 0.0
        %413 = vmatpush.msra.mxu0 %v308
        %414 = vmatpush.msra.mxu0 %v300
        %415 = vmatpush.msra.mxu0 %v292
        %416 = vmatpush.msra.mxu0 %v284
        %417 = vmatpush.msra.mxu0 %v276
        %418 = vmatmul.f32.gmra.mxu0 %v320
        %v419 = vpop.f32.mrf.mxu0
        %v420 = vadd.f32 %v316, %v419
        %421 = vdwg.mxu0
        %422 = vmatpush.msra.mxu0 0.0
        %423 = vmatpush.msra.mxu0 0.0
        %424 = vmatpush.msra.mxu0 0.0
        %425 = vmatpush.msra.mxu0 0.0
        %426 = vmatpush.msra.mxu0 0.0
        %427 = vmatpush.msra.mxu0 0.0
        %428 = vmatpush.msra.mxu0 0.0
        %429 = vmatpush.msra.mxu0 0.0
        %430 = vmatpush.msra.mxu0 0.0
        %431 = vmatpush.msra.mxu0 0.0
        %432 = vmatpush.msra.mxu0 0.0
        %433 = vmatpush.msra.mxu0 %v309
        %434 = vmatpush.msra.mxu0 %v301
        %435 = vmatpush.msra.mxu0 %v293
        %436 = vmatpush.msra.mxu0 %v285
        %437 = vmatpush.msra.mxu0 %v277
        %438 = vmatmul.f32.gmra.mxu0 %v320
        %v439 = vpop.f32.mrf.mxu0
        %v440 = vadd.f32 %v316, %v439
        %441 = vdwg.mxu0
        %442 = vmatpush.msra.mxu0 0.0
        %443 = vmatpush.msra.mxu0 0.0
        %444 = vmatpush.msra.mxu0 0.0
        %445 = vmatpush.msra.mxu0 0.0
        %446 = vmatpush.msra.mxu0 0.0
        %447 = vmatpush.msra.mxu0 0.0
        %448 = vmatpush.msra.mxu0 0.0
        %449 = vmatpush.msra.mxu0 0.0
        %450 = vmatpush.msra.mxu0 0.0
        %451 = vmatpush.msra.mxu0 0.0
        %452 = vmatpush.msra.mxu0 0.0
        %453 = vmatpush.msra.mxu0 %v310
        %454 = vmatpush.msra.mxu0 %v302
        %455 = vmatpush.msra.mxu0 %v294
        %456 = vmatpush.msra.mxu0 %v286
        %457 = vmatpush.msra.mxu0 %v278
        %458 = vmatmul.f32.gmra.mxu0 %v320
        %v459 = vpop.f32.mrf.mxu0
        %v460 = vadd.f32 %v316, %v459
        %461 = vdwg.mxu0
        %462 = vmatpush.msra.mxu0 0.0
        %463 = vmatpush.msra.mxu0 0.0
        %464 = vmatpush.msra.mxu0 0.0
        %465 = vmatpush.msra.mxu0 0.0
        %466 = vmatpush.msra.mxu0 0.0
        %467 = vmatpush.msra.mxu0 0.0
        %468 = vmatpush.msra.mxu0 0.0
        %469 = vmatpush.msra.mxu0 0.0
        %470 = vmatpush.msra.mxu0 0.0
        %471 = vmatpush.msra.mxu0 0.0
        %472 = vmatpush.msra.mxu0 0.0
        %473 = vmatpush.msra.mxu0 %v311
        %474 = vmatpush.msra.mxu0 %v303
        %475 = vmatpush.msra.mxu0 %v295
        %476 = vmatpush.msra.mxu0 %v287
        %477 = vmatpush.msra.mxu0 %v279
        %478 = vmatmul.f32.gmra.mxu0 %v320
        %v479 = vpop.f32.mrf.mxu0
        %v480 = vadd.f32 %v316, %v479
        %481 = vdwg.mxu0
        %482 = vst [vmem:[%s269] sm:$0xff] %v340
        %483 = vst [vmem:[%s269 + $0x8] sm:$0xff] %v360
        %484 = vst [vmem:[%s269 + $0x10] sm:$0xff] %v380
        %485 = vst [vmem:[%s269 + $0x18] sm:$0xff] %v400
        %486 = vst [vmem:[%s269 + $0x20] sm:$0xff] %v420
        %487 = vst [vmem:[%s269 + $0x28] sm:$0xff] %v440
        %488 = vst [vmem:[%s269 + $0x30] sm:$0xff] %v460
        %489 = vst [vmem:[%s269 + $0x38] sm:$0xff] %v480
        %s490 = smul.u32 8, %s14
        %p491 = scmp.lt.s32.totalorder %s490, 15
        %s492 = scalar_select %p491, %s490, 15
        %s493 = smul.addr %s492, 8
        %s494 = scalar_lea.vmem %s3, %s493
        // Predicated region
        $region56: #{_lambda_.1} parent=50 // pred_check
          %p495 = pneg %p100
        $region57: #{_lambda_.1} parent=50 // pred_check_branch
          %497 = sbr.rel (%p495) target = $region59
        $region58: #{_lambda_.1} parent=50 // pred_region
          %s498 = smul.u32 8, %s14
        $region59: #{_lambda_.1} parent=50 // pred_fallthru
          _
      $region51: #{_lambda_.1} parent=5 // pred_fallthru
        _
      %p499 = scmp.le.s32.totalorder 2, %s9
      // Predicated region
      $region60: #{_lambda_.1} parent=5 // pred_check
        %p500 = pneg %p499
      $region61: #{_lambda_.1} parent=5 // pred_check_branch
        %502 = sbr.rel (%p500) target = $region63
      $region62: #{_lambda_.1} parent=5 // pred_region
        %s503 = ssub.s32 %s9, 2
        // Predicated region
        $region64: #{_lambda_.1} parent=62 // pred_check
          %p504 = pneg %p106
        $region65: #{_lambda_.1} parent=62 // pred_check_branch
          %506 = sbr.rel (%p504) target = $region67
        $region66: #{_lambda_.1} parent=62 // pred_region
          %s507 = smul.u32 8, %s15
          %p508 = scmp.lt.s32.totalorder %s507, 15
          %s509 = scalar_select %p508, %s507, 15
          %s510 = smul.addr %s509, 8
          %s511 = scalar_lea.vmem %s3, %s510
        $region67: #{_lambda_.1} parent=62 // pred_fallthru
          _
      $region63: #{_lambda_.1} parent=5 // pred_fallthru
        _
    $region6: #{_lambda_.1} parent=1 // loop_footer
      %s13 = sadd.s32 1, %s9
    $region7: #{_lambda_.1} parent=1 // loop_footer_branch
      %8 = sbr.rel target = $region3
    $region8: #{_lambda_.1} parent=1 // loop_exit
      _

</llo_original>
